<compile_context>
chip_gen: v7x
topology: tpu7x:2x2x1
jax: 0.10.0
libtpu: 0.0.40
codegen_flags: <defaults>
</compile_context>

<pallas_src>
import functools

import jax
import jax.numpy as jnp
from jax.experimental import pallas as pl
from jax.experimental.pallas import tpu as pltpu


def _round_up(x, m):
    return ((x + m - 1) // m) * m


def _linear_kernel_f32(x_ref, w_ref, b_ref, o_ref, *, compute_dtype):
    """f32-output path: accumulate directly into the resident output block."""
    k = pl.program_id(2)

    @pl.when(k == 0)
    def _():
        o_ref[...] = jnp.zeros_like(o_ref)

    a = x_ref[...]
    w = w_ref[...]
    if compute_dtype is not None:
        a = a.astype(compute_dtype)
        w = w.astype(compute_dtype)
    # Plain (tm, tk) @ (tk, tn): weight was pre-transposed once in the wrapper, so the
    # contraction dim is already major on the RHS (no per-step XLU transpose).
    o_ref[...] += jnp.dot(a, w, preferred_element_type=jnp.float32)

    @pl.when(k == pl.num_programs(2) - 1)
    def _():
        o_ref[...] += b_ref[...]


def _linear_kernel_acc(x_ref, w_ref, b_ref, o_ref, acc_ref, *, compute_dtype):
    """Generic path (non-f32 output): f32 VMEM accumulator, cast on the final K step."""
    k = pl.program_id(2)

    @pl.when(k == 0)
    def _():
        acc_ref[...] = jnp.zeros_like(acc_ref)

    a = x_ref[...]
    w = w_ref[...]
    if compute_dtype is not None:
        a = a.astype(compute_dtype)
        w = w.astype(compute_dtype)
    acc_ref[...] += jnp.dot(a, w, preferred_element_type=jnp.float32)

    @pl.when(k == pl.num_programs(2) - 1)
    def _():
        o_ref[...] = (acc_ref[...] + b_ref[...]).astype(o_ref.dtype)


def expert_forward(x, weight, bias, *, tm=512, tn=512, tk=1024, compute_dtype=None):
    """x: (B, S, D_in); weight: (D_out, D_in); bias: (D_out,). Returns (B, S, D_out)."""
    B, S, K = x.shape
    N = weight.shape[0]
    M = B * S

    x2d = x.reshape(M, K)
    w_t = weight.T                              # one-time (D_in, D_out) layout
    b2d = bias.reshape(1, N).astype(jnp.float32)

    # --- Tile selection -------------------------------------------------------
    # Legal block shapes: last dim % 128 == 0 or == full dim; 2nd-last % 8 == 0 or
    # == full dim. Clamping a tile to the full dim is always legal and, because the
    # corresponding grid axis collapses to 1, makes that operand effectively
    # VMEM-resident (constant block index => DMA'd once).
    tm = M if M <= tm else tm                   # 512 % 8 == 0
    tn = N if N <= tn else tn                   # 512 % 128 == 0
    if K <= tk:
        tk = K                                  # full-K tile, no padding needed
        Kp = K
    else:
        Kp = _round_up(K, tk)                   # 1024 % 128 == 0 and % 8 == 0
        if Kp != K:
            # Zero-pad ONLY the contraction axis: OOB garbage along K would corrupt
            # real outputs, unlike OOB garbage along M/N which lands in masked rows.
            x2d = jnp.pad(x2d, ((0, 0), (0, Kp - K)))
            w_t = jnp.pad(w_t, ((0, Kp - K), (0, 0)))

    grid = (pl.cdiv(M, tm), pl.cdiv(N, tn), Kp // tk)
    gm, gn, _ = grid

    itemsize = jnp.dtype(x.dtype).itemsize
    cost = pl.CostEstimate(
        flops=2 * M * N * Kp,
        transcendentals=0,
        bytes_accessed=(
            M * Kp * itemsize * gn        # x streamed once per N tile
            + Kp * N * itemsize * gm      # W streamed once per M tile (1x when resident)
            + N * 4 * gm                  # bias
            + M * N * itemsize            # output written once
        ),
    )

    in_specs = [
        pl.BlockSpec((tm, tk), lambda i, j, k: (i, k)),   # x tile
        pl.BlockSpec((tk, tn), lambda i, j, k: (k, j)),   # (D_in, D_out) weight tile
        pl.BlockSpec((1, tn), lambda i, j, k: (0, j)),    # bias tile
    ]
    out_spec = pl.BlockSpec((tm, tn), lambda i, j, k: (i, j))

    out_is_f32 = jnp.dtype(x.dtype) == jnp.float32
    if out_is_f32:
        kernel = functools.partial(_linear_kernel_f32, compute_dtype=compute_dtype)
        scratch_shapes = []
    else:
        kernel = functools.partial(_linear_kernel_acc, compute_dtype=compute_dtype)
        scratch_shapes = [pltpu.VMEM((tm, tn), jnp.float32)]

    out = pl.pallas_call(
        kernel,
        out_shape=jax.ShapeDtypeStruct((M, N), x.dtype),
        grid_spec=pltpu.PrefetchScalarGridSpec(
            num_scalar_prefetch=0,
            grid=grid,
            in_specs=in_specs,
            out_specs=out_spec,
            scratch_shapes=scratch_shapes,
        ),
        compiler_params=pltpu.CompilerParams(
            # M/N tiles shard across TensorCores (v7x); K reduction stays last/arbitrary.
            dimension_semantics=("parallel", "parallel", "arbitrary"),
            # ~10 MiB used at default tiles; 48 MiB cap is safe on v7x (64 MiB VMEM)
            # and leaves headroom for deeper buffering on v5e/v6e.
            vmem_limit_bytes=48 * 1024 * 1024,
        ),
        cost_estimate=cost,
    )(x2d, w_t, b2d)

    return out.reshape(B, S, N)


if __name__ == "__main__":
    input_dim = 5
    output_dim = 3
    batch_size = 2
    seq_len = 10

    key = jax.random.PRNGKey(0)
    kx, kw, kb = jax.random.split(key, 3)

    # Deterministic param init (matching nn.Linear's uniform(-1/sqrt(fan_in), ...)).
    bound = 1.0 / jnp.sqrt(jnp.float32(input_dim))
    weight = jax.random.uniform(
        kw, (output_dim, input_dim), jnp.float32, -bound, bound
    )
    bias = jax.random.uniform(kb, (output_dim,), jnp.float32, -bound, bound)

    x = jax.random.normal(kx, (batch_size, seq_len, input_dim), jnp.float32)

    fwd = jax.jit(expert_forward)
    y = fwd(x, weight, bias)
    jax.block_until_ready(y)

    # Reference check against plain JAX.
    y_ref = jnp.einsum("bsd,od->bso", x, weight) + bias
    assert y.shape == (batch_size, seq_len, output_dim)
    assert jnp.allclose(y, y_ref, atol=1e-5, rtol=1e-5)

    print("KERNEL_OK")
</pallas_src>

<mosaic_0001>
module attributes {stable_mosaic.version = 11 : i64} {
  func.func @_linear_kernel_f32(%arg0: i32, %arg1: i32, %arg2: i32, %arg3: memref<20x5xf32, #tpu.memory_space<vmem>>, %arg4: memref<5x3xf32, #tpu.memory_space<vmem>>, %arg5: memref<1x3xf32, #tpu.memory_space<vmem>>, %arg6: memref<20x3xf32, #tpu.memory_space<vmem>>) attributes {dimension_semantics = [#tpu.dimension_semantics<parallel>, #tpu.dimension_semantics<parallel>, #tpu.dimension_semantics<arbitrary>], iteration_bounds = array<i64: 1, 1, 1>, scalar_prefetch = 0 : i64, scratch_operands = 0 : i64, tpu.core_type = #tpu.core_type<tc>, window_params = [{transform_indices = @transform_0, window_bounds = array<i64: 20, 5>}, {transform_indices = @transform_1, window_bounds = array<i64: 5, 3>}, {transform_indices = @transform_2, window_bounds = array<i64: 1, 3>}, {transform_indices = @transform_3, window_bounds = array<i64: 20, 3>}]} {
    %c0_i32 = arith.constant 0 : i32
    %0 = arith.cmpi eq, %arg2, %c0_i32 : i32
    %1 = arith.extui %0 : i1 to i32
    %c0_i32_0 = arith.constant 0 : i32
    %2 = arith.cmpi ne, %1, %c0_i32_0 : i32
    scf.if %2 {
      %cst_10 = arith.constant 0.000000e+00 : f32
      %12 = vector.broadcast %cst_10 : f32 to vector<20x3xf32>
      %c0_11 = arith.constant 0 : index
      %c0_12 = arith.constant 0 : index
      %13 = vector.load %arg6[%c0_11, %c0_12] : memref<20x3xf32, #tpu.memory_space<vmem>>, vector<20x3xf32>
      tpu.vector_store %arg6[%c0_11, %c0_12], %12 {strides = array<i32>} : memref<20x3xf32, #tpu.memory_space<vmem>>, vector<20x3xf32>,
    } else {
    }
    %c0 = arith.constant 0 : index
    %c0_1 = arith.constant 0 : index
    %3 = vector.load %arg3[%c0, %c0_1] : memref<20x5xf32, #tpu.memory_space<vmem>>, vector<20x5xf32>
    %c0_2 = arith.constant 0 : index
    %c0_3 = arith.constant 0 : index
    %4 = vector.load %arg4[%c0_2, %c0_3] : memref<5x3xf32, #tpu.memory_space<vmem>>, vector<5x3xf32>
    %c0_4 = arith.constant 0 : index
    %c0_5 = arith.constant 0 : index
    %5 = vector.load %arg6[%c0_4, %c0_5] : memref<20x3xf32, #tpu.memory_space<vmem>>, vector<20x3xf32>
    %cst = arith.constant dense<0.000000e+00> : vector<20x3xf32>
    %6 = tpu.matmul %3, %4, %cst {dimension_numbers = #tpu.dot_dimension_numbers<[1], [0], [0], [1], [0, 0, 1, 1], [], []>} : vector<20x5xf32>, vector<5x3xf32>, vector<20x3xf32> -> vector<20x3xf32>
    %7 = arith.addf %5, %6 : vector<20x3xf32>
    %c0_6 = arith.constant 0 : index
    %c0_7 = arith.constant 0 : index
    %8 = vector.load %arg6[%c0_6, %c0_7] : memref<20x3xf32, #tpu.memory_space<vmem>>, vector<20x3xf32>
    tpu.vector_store %arg6[%c0_6, %c0_7], %7 {strides = array<i32>} : memref<20x3xf32, #tpu.memory_space<vmem>>, vector<20x3xf32>,
    %c0_i32_8 = arith.constant 0 : i32
    %9 = arith.cmpi eq, %arg2, %c0_i32_8 : i32
    %10 = arith.extui %9 : i1 to i32
    %c0_i32_9 = arith.constant 0 : i32
    %11 = arith.cmpi ne, %10, %c0_i32_9 : i32
    scf.if %11 {
      %c0_10 = arith.constant 0 : index
      %c0_11 = arith.constant 0 : index
      %12 = vector.load %arg6[%c0_10, %c0_11] : memref<20x3xf32, #tpu.memory_space<vmem>>, vector<20x3xf32>
      %c0_12 = arith.constant 0 : index
      %c0_13 = arith.constant 0 : index
      %13 = vector.load %arg5[%c0_12, %c0_13] : memref<1x3xf32, #tpu.memory_space<vmem>>, vector<1x3xf32>
      %14 = vector.broadcast %13 : vector<1x3xf32> to vector<20x3xf32>
      %15 = arith.addf %12, %14 : vector<20x3xf32>
      %c0_14 = arith.constant 0 : index
      %c0_15 = arith.constant 0 : index
      %16 = vector.load %arg6[%c0_14, %c0_15] : memref<20x3xf32, #tpu.memory_space<vmem>>, vector<20x3xf32>
      tpu.vector_store %arg6[%c0_14, %c0_15], %15 {strides = array<i32>} : memref<20x3xf32, #tpu.memory_space<vmem>>, vector<20x3xf32>,
    } else {
    }
    return
  }
  func.func @transform_0(%arg0: i32, %arg1: i32, %arg2: i32) -> (i32, i32) {
    %c0_i32 = arith.constant 0 : i32
    return %arg0, %arg2 : i32, i32
  }
  func.func @transform_1(%arg0: i32, %arg1: i32, %arg2: i32) -> (i32, i32) {
    %c0_i32 = arith.constant 0 : i32
    return %arg2, %arg1 : i32, i32
  }
  func.func @transform_2(%arg0: i32, %arg1: i32, %arg2: i32) -> (i32, i32) {
    %c0_i32 = arith.constant 0 : i32
    %c0_i32_0 = arith.constant 0 : i32
    return %c0_i32, %arg1 : i32, i32
  }
  func.func @transform_3(%arg0: i32, %arg1: i32, %arg2: i32) -> (i32, i32) {
    %c0_i32 = arith.constant 0 : i32
    return %arg0, %arg1 : i32, i32
  }
}

</mosaic_0001>

<llo_original>
// kernel: expert_forward.1
$region0: #{expert_forward.1}
  #allocation0 [shape = 'u32[]', space=smem, size = 0x4, offset = 0x4, fixed_abs, tag = 'smem constant byte address 0x4 - core index']
  #allocation1 [shape = 'u32[144,128]{1,0:T(1,128)}', space=vmem, size = 0x12000, scoped, tag = 'internal scratch']
  %s0 = inlined_call_operand.vmem [shape: f32[20,5], index: 0, kind: input, shape index: {}]
  %s1 = inlined_call_operand.vmem [shape: f32[5,3], index: 1, kind: input, shape index: {}]
  %s2 = inlined_call_operand.vmem [shape: f32[1,3], index: 2, kind: input, shape index: {}]
  %s3 = inlined_call_operand.vmem [shape: f32[20,3], index: 3, kind: output, shape index: {}]
  %s4 = sld [smem:[#allocation0]]
  $region30: #{expert_forward.1} parent=0
    _
  %s6 = ssub.s32 1, %s4
  %s7 = scalar_select 0, %s6, %s4
  // Predicated region
  $region2: #{expert_forward.1} parent=0 // pred_check
    _
  $region3: #{expert_forward.1} parent=0 // pred_check_branch
    %9 = sbr.rel (0) target = $region5
  $region4: #{expert_forward.1} parent=0 // pred_region
    _
  $region5: #{expert_forward.1} parent=0 // pred_fallthru
    _
  // Predicated region
  $region6: #{expert_forward.1} parent=0 // pred_check
    _
  $region7: #{expert_forward.1} parent=0 // pred_check_branch
    %11 = sbr.rel (0) target = $region9
  $region8: #{expert_forward.1} parent=0 // pred_region
    _
  $region9: #{expert_forward.1} parent=0 // pred_fallthru
    _
  // Predicated region
  $region10: #{expert_forward.1} parent=0 // pred_check
    _
  $region11: #{expert_forward.1} parent=0 // pred_check_branch
    %13 = sbr.rel (0) target = $region13
  $region12: #{expert_forward.1} parent=0 // pred_region
    _
  $region13: #{expert_forward.1} parent=0 // pred_fallthru
    _
  %p14 = scmp.eq.s32.totalorder 0, 0
  // Predicated region
  $region14: #{expert_forward.1} parent=0 // pred_check
    %p15 = pneg %p14
  $region15: #{expert_forward.1} parent=0 // pred_check_branch
    %17 = sbr.rel (%p15) target = $region17
  $region16: #{expert_forward.1} parent=0 // pred_region
    %vm18 = vcmask 23552
    %19 = vst.msk [vmem:[%s3] sm:$0xff] %vm18, 0.0
    %20 = vst.msk [vmem:[%s3 + $0x8] sm:$0xff] %vm18, 0.0
    %vm21 = vcmask 19456
    %22 = vst.msk [vmem:[%s3 + $0x10] sm:$0xf] %vm21, 0.0
  $region17: #{expert_forward.1} parent=0 // pred_fallthru
    _
  %v23 = vld [vmem:[%s0] sm:$0xff]
  %v24 = vld [vmem:[%s0 + $0x8] sm:$0xff]
  %v25 = vld [vmem:[%s0 + $0x10] sm:$0xf]
  %v26 = vld [vmem:[%s1] sm:$0x1f]
  %v27 = vld [vmem:[%s3] sm:$0xff]
  %v28 = vld [vmem:[%s3 + $0x8] sm:$0xff]
  %v29 = vld [vmem:[%s3 + $0x10] sm:$0xf]
  %vm30 = vcmask 39936
  %v32 = vsel %vm30, %v23, 0
  %v35 = vsel %vm30, %v24, 0
  %v38 = vsel %vm30, %v25, 0
  %vm40 = vcmask 1044480
  %v42 = vsel %vm40, %v26, 0
  %44 = vmatprep.subr.mxu0 0.0
  %45 = vmatpush1.msra.mxu0 %v42
  %46 = vmatprep.subr.mxu0 0.0
  %47 = vmatpush1.msra.mxu0 0.0
  %48 = vmatprep.subr.mxu0 0.0
  %49 = vmatpush1.msra.mxu0 0.0
  %50 = vmatprep.subr.mxu0 0.0
  %51 = vmatpush1.msra.mxu0 0.0
  %52 = vmatprep.subr.mxu0 0.0
  %53 = vmatpush1.msra.mxu0 0.0
  %54 = vmatprep.subr.mxu0 0.0
  %55 = vmatpush1.msra.mxu0 0.0
  %56 = vmatprep.subr.mxu0 0.0
  %57 = vmatpush1.msra.mxu0 0.0
  %58 = vmatprep.subr.mxu0 0.0
  %59 = vmatpush1.msra.mxu0 0.0
  %60 = vmatprep.subr.mxu0 0.0
  %61 = vmatpush1.msra.mxu0 0.0
  %62 = vmatprep.subr.mxu0 0.0
  %63 = vmatpush1.msra.mxu0 0.0
  %64 = vmatprep.subr.mxu0 0.0
  %65 = vmatpush1.msra.mxu0 0.0
  %66 = vmatprep.subr.mxu0 0.0
  %67 = vmatpush1.msra.mxu0 0.0
  %68 = vmatprep.subr.mxu0 0.0
  %69 = vmatpush1.msra.mxu0 0.0
  %70 = vmatprep.subr.mxu0 0.0
  %71 = vmatpush1.msra.mxu0 0.0
  %72 = vmatprep.subr.mxu0 0.0
  %73 = vmatpush1.msra.mxu0 0.0
  %74 = vmatprep.subr.mxu0 0.0
  %75 = vmatpush1.msra.mxu0 0.0
  %76 = vmatprep.subr.mxu0 0.0
  %77 = vmatpush1.msra.mxu0 0.0
  %78 = vmatprep.subr.mxu0 0.0
  %79 = vmatpush1.msra.mxu0 0.0
  %80 = vmatprep.subr.mxu0 0.0
  %81 = vmatpush1.msra.mxu0 0.0
  %82 = vmatprep.subr.mxu0 0.0
  %83 = vmatpush1.msra.mxu0 0.0
  %84 = vmatprep.subr.mxu0 0.0
  %85 = vmatpush1.msra.mxu0 0.0
  %86 = vmatprep.subr.mxu0 0.0
  %87 = vmatpush1.msra.mxu0 0.0
  %88 = vmatprep.subr.mxu0 0.0
  %89 = vmatpush1.msra.mxu0 0.0
  %90 = vmatprep.subr.mxu0 0.0
  %91 = vmatpush1.msra.mxu0 0.0
  %92 = vmatprep.subr.mxu0 0.0
  %93 = vmatpush1.msra.mxu0 0.0
  %94 = vmatprep.subr.mxu0 0.0
  %95 = vmatpush1.msra.mxu0 0.0
  %96 = vmatprep.subr.mxu0 0.0
  %97 = vmatpush1.msra.mxu0 0.0
  %98 = vmatprep.subr.mxu0 0.0
  %99 = vmatpush1.msra.mxu0 0.0
  %100 = vmatprep.subr.mxu0 0.0
  %101 = vmatpush1.msra.mxu0 0.0
  %102 = vmatprep.subr.mxu0 0.0
  %103 = vmatpush1.msra.mxu0 0.0
  %104 = vmatprep.subr.mxu0 0.0
  %105 = vmatpush1.msra.mxu0 0.0
  %106 = vmatprep.subr.mxu0 0.0
  %107 = vmatpush1.msra.mxu0 0.0
  %108 = vmatprep.mubr.f32.mxu0 0.0
  %109 = vmatmul.mubr.f32.gmra.mrb[0].mxu0 %v32
  %v110 = vpop.f32.mrb[0].mxu0
  %v111 = vadd.f32 0.0, %v110
  %v112 = vpop.f32.mrb[0].mxu0
  %113 = vmatprep.mubr.f32.mxu0 0.0
  %114 = vmatmul.mubr.f32.gmra.mrb[0].mxu0 %v35
  %v115 = vpop.f32.mrb[0].mxu0
  %v116 = vadd.f32 0.0, %v115
  %v117 = vpop.f32.mrb[0].mxu0
  %118 = vmatprep.mubr.f32.mxu0 0.0
  %119 = vmatmul.mubr.f32.gmra.mrb[0].mxu0 %v38
  %v120 = vpop.f32.mrb[0].mxu0
  %v121 = vadd.f32 0.0, %v120
  %v122 = vpop.f32.mrb[0].mxu0
  %123 = vdwg.mxu0
  %v124 = vadd.f32 %v27, %v111
  %v125 = vadd.f32 %v28, %v116
  %v126 = vadd.f32 %v29, %v121
  %vm127 = vcmask 23552
  %128 = vst.msk [vmem:[%s3] sm:$0xff] %vm127, %v124
  %129 = vst.msk [vmem:[%s3 + $0x8] sm:$0xff] %vm127, %v125
  %vm130 = vcmask 19456
  %131 = vst.msk [vmem:[%s3 + $0x10] sm:$0xf] %vm130, %v126
  // Predicated region
  $region18: #{expert_forward.1} parent=0 // pred_check
    %p132 = pneg %p14
  $region19: #{expert_forward.1} parent=0 // pred_check_branch
    %134 = sbr.rel (%p132) target = $region21
  $region20: #{expert_forward.1} parent=0 // pred_region
    %v135 = vld [vmem:[%s3] sm:$0xff]
    %v136 = vld [vmem:[%s3 + $0x8] sm:$0xff]
    %v137 = vld [vmem:[%s3 + $0x10] sm:$0xf]
    %v138 = vld [vmem:[%s2] sm:$0x1]
    %v140 = vlaneseq
    %v141 = vshrl.u32 %v140, 7
    %v142 = vsub.s32 0, %v141
    %v143 = vrot.slane %v138, %v142
    %v145 = vadd.f32 %v135, %v143
    %v146 = vadd.f32 %v136, %v143
    %v147 = vadd.f32 %v137, %v143
    %148 = vst.msk [vmem:[%s3] sm:$0xff] %vm127, %v145
    %149 = vst.msk [vmem:[%s3 + $0x8] sm:$0xff] %vm127, %v146
    %150 = vst.msk [vmem:[%s3 + $0x10] sm:$0xf] %vm130, %v147
  $region21: #{expert_forward.1} parent=0 // pred_fallthru
    _
  // Predicated region
  $region22: #{expert_forward.1} parent=0 // pred_check
    _
  $region23: #{expert_forward.1} parent=0 // pred_check_branch
    %152 = sbr.rel (0) target = $region25
  $region24: #{expert_forward.1} parent=0 // pred_region
    _
  $region25: #{expert_forward.1} parent=0 // pred_fallthru
    _
  // Predicated region
  $region26: #{expert_forward.1} parent=0 // pred_check
    _
  $region27: #{expert_forward.1} parent=0 // pred_check_branch
    %154 = sbr.rel (0) target = $region29
  $region28: #{expert_forward.1} parent=0 // pred_region
    _
  $region29: #{expert_forward.1} parent=0 // pred_fallthru
    _

</llo_original>
